<compile_context>
chip_gen: v6e
topology: v6e:2x2x1
jax: 0.10.0
libtpu: 0.0.40
codegen_flags: <defaults>
</compile_context>

<pallas_src>
import math

import jax
import jax.numpy as jnp
from jax import lax
from jax.experimental import pallas as pl
from jax.experimental.pallas import tpu as pltpu

LANE = 128


def _cdiv(a, b):
    return -(-a // b)


def _round_up(a, b):
    return _cdiv(a, b) * b


def _padded_slice_bytes(t):
    """VMEM bytes of one leading-index slice of a streamed block (incl. tile padding)."""
    c, l = t.shape[1], t.shape[2]
    itemsize = t.dtype.itemsize
    packing = max(1, 4 // itemsize)          # sublane packing for sub-32-bit dtypes
    return _round_up(c, 8 * packing) * _round_up(l, LANE) * itemsize


def _make_kernel(n_in, n_cores, n_blocks, nbc, bb, valid_last):
    has_rem = valid_last != bb               # last batch-block is partially out of range
    has_dead = n_cores * nbc > n_blocks      # trailing no-op step on the last core

    def _block_sum(ref, square, valid_rows=None):
        if valid_rows is None:
            x = ref[...]
        else:                                # static sub-slice of the leading dim
            x = ref[pl.ds(0, valid_rows), :, :]
        x = x.astype(jnp.float32)
        if square:
            x = x * x
        return jnp.sum(x)

    def kernel(*refs):
        in_refs = refs[:n_in]                # [z, log_s_0, ..., log_s_{k-1}] blocks
        out_ref = refs[n_in]                 # (1, 128) per-core partial-sum row
        acc_ref = refs[n_in + 1]             # SMEM (2,): [sum(z*z), sum(log_s)]
        c = pl.program_id(0)
        i = pl.program_id(1)
        g = c * nbc + i                      # global batch-block index

        @pl.when(i == 0)
        def _init():
            acc_ref[0] = jnp.float32(0.0)
            acc_ref[1] = jnp.float32(0.0)

        def accumulate(valid_rows=None):
            acc_ref[0] += _block_sum(in_refs[0], square=True, valid_rows=valid_rows)
            ss = _block_sum(in_refs[1], square=False, valid_rows=valid_rows)
            for r in in_refs[2:]:
                ss = ss + _block_sum(r, square=False, valid_rows=valid_rows)
            acc_ref[1] += ss

        if has_rem:
            is_last = g == n_blocks - 1
            not_last = jnp.logical_not(is_last)
            if has_dead:
                not_last = jnp.logical_and(not_last, g < n_blocks)
            pl.when(not_last)(accumulate)
            pl.when(is_last)(lambda: accumulate(valid_last))
        elif has_dead:
            pl.when(g < n_blocks)(accumulate)
        else:
            accumulate()

        @pl.when(i == nbc - 1)
        def _finalize():                     # lane-dense per-core output row
            lane = lax.broadcasted_iota(jnp.int32, (1, LANE), 1)
            out_ref[...] = jnp.where(lane == 0, acc_ref[0],
                                     jnp.where(lane == 1, acc_ref[1], 0.0))

    return kernel


def waveglow_loss(z, log_s_list, log_det_W_list, sigma=1.0,
                  target_block_bytes=4 << 20, block_batch=None):
    """Pallas-TPU WaveGlowLoss.forward. Returns a scalar."""
    z = jnp.asarray(z)
    assert z.ndim == 3, "WaveGlowLoss normalizes by z.size(0)*z.size(1)*z.size(2)"
    assert len(log_s_list) >= 1, "need at least one log_s tensor"
    B = z.shape[0]
    n_norm = z.shape[0] * z.shape[1] * z.shape[2]

    # Present each streamed tensor as (B, C, L) using only free contiguous reshapes.
    streams = []
    for t in [z] + [jnp.asarray(s) for s in log_s_list]:
        assert t.shape[0] == B, "z and every log_s must share the leading (batch) dim"
        if t.ndim < 3:
            # TODO(synk): (B,1,L) blocks waste sublane padding; correct but never
            # hit by WaveGlow's 3-D tensors.
            t = t.reshape(B, 1, -1)
        elif t.ndim > 3:
            t = t.reshape(B, math.prod(t.shape[1:-1]), t.shape[-1])
        streams.append(t)
    n_in = len(streams)

    bytes_per = sum(math.prod(t.shape[1:]) * t.dtype.itemsize for t in streams)
    padded_per = sum(_padded_slice_bytes(t) for t in streams)

    if block_batch is None:
        vmem_budget = 20 << 20                       # double-buffered input windows
        bb = min(B,
                 max(1, target_block_bytes // max(bytes_per, 1)),
                 max(1, vmem_budget // max(2 * padded_per, 1)))
    else:
        bb = block_batch
    bb = int(max(1, min(bb, B)))
    # TODO(synk): if a single batch element alone exceeds VMEM, the (C, T) dims
    # would also need blocking; not needed at WaveGlow sizes.

    n_blocks = _cdiv(B, bb)
    n_cores = 2 if n_blocks >= 2 else 1              # use both v7x TCs; harmless on v5e/v6e
    nbc = _cdiv(n_blocks, n_cores)
    valid_last = B - (n_blocks - 1) * bb

    def _imap(ndim):
        def imap(c, i):
            g = jnp.minimum(c * nbc + i, n_blocks - 1)   # clamp the dead trailing step
            return (g,) + (0,) * (ndim - 1)
        return imap

    in_specs = [pl.BlockSpec((bb,) + tuple(t.shape[1:]), _imap(t.ndim)) for t in streams]
    vmem_limit = int(min(max(4 * bb * padded_per + (8 << 20), 16 << 20), 56 << 20))

    partials = pl.pallas_call(
        _make_kernel(n_in, n_cores, n_blocks, nbc, bb, valid_last),
        out_shape=jax.ShapeDtypeStruct((n_cores, LANE), jnp.float32),
        grid=(n_cores, nbc),
        in_specs=in_specs,
        out_specs=pl.BlockSpec((1, LANE), lambda c, i: (c, 0)),
        scratch_shapes=[pltpu.SMEM((2,), jnp.float32)],
        compiler_params=pltpu.CompilerParams(
            dimension_semantics=("parallel", "arbitrary"),
            vmem_limit_bytes=vmem_limit),
    )(*streams)

    # Trivial scalar epilogue (a handful of flops) outside the kernel.
    zz = jnp.sum(partials[:, 0])
    ss = jnp.sum(partials[:, 1])
    ldw = [jnp.asarray(v, jnp.float32).reshape(())
           for v in log_det_W_list[:len(log_s_list)]]
    ldw_total = jnp.sum(jnp.stack(ldw))
    inv_2s2 = 1.0 / (2.0 * float(sigma) * float(sigma))
    return (zz * inv_2s2 - ss - ldw_total) / float(n_norm)


def _reference_loss(z, log_s_list, log_det_W_list, sigma=1.0):
    log_s_total = sum(jnp.sum(s) for s in log_s_list)
    log_det_total = sum(jnp.asarray(v, jnp.float32)
                        for v in log_det_W_list[:len(log_s_list)])
    loss = jnp.sum(z * z) / (2.0 * sigma * sigma) - log_s_total - log_det_total
    return loss / (z.shape[0] * z.shape[1] * z.shape[2])


if __name__ == "__main__":
    # WaveGlow-like shapes: z is (B, C, T); each flow contributes a
    # (B, C//2, T) log_s tensor and a scalar log_det_W.
    B, C, T = 2, 8, 256
    n_flows = 3
    sigma = 1.0

    keys = jax.random.split(jax.random.PRNGKey(0), 1 + n_flows)
    z = jax.random.normal(keys[0], (B, C, T), jnp.float32)
    log_s_list = [0.1 * jax.random.normal(keys[1 + i], (B, C // 2, T), jnp.float32)
                  for i in range(n_flows)]
    log_det_W_list = [jnp.asarray(0.3 * (i + 1), jnp.float32) for i in range(n_flows)]

    fn = jax.jit(lambda a, b, d: waveglow_loss(a, b, d, sigma=sigma))
    loss = jax.block_until_ready(fn(z, log_s_list, log_det_W_list))
    ref = _reference_loss(z, log_s_list, log_det_W_list, sigma=sigma)
    assert loss.shape == (), loss.shape
    assert bool(jnp.isfinite(loss))
    assert bool(jnp.allclose(loss, ref, rtol=1e-4, atol=1e-5)), (loss, ref)

    # Second config: odd batch + forced batch-block of 2 exercises the 2-wide
    # parallel split, the clamped dead step and the partially-valid last block.
    B2 = 5
    keys2 = jax.random.split(jax.random.PRNGKey(1), 1 + n_flows)
    z2 = jax.random.normal(keys2[0], (B2, C, T), jnp.float32)
    ls2 = [0.05 * jax.random.normal(keys2[1 + i], (B2, C // 2, T), jnp.float32)
           for i in range(n_flows)]
    ldw2 = [jnp.asarray(0.2 * (i + 1), jnp.float32) for i in range(n_flows)]
    fn2 = jax.jit(lambda a, b, d: waveglow_loss(a, b, d, sigma=0.8, block_batch=2))
    loss2 = jax.block_until_ready(fn2(z2, ls2, ldw2))
    ref2 = _reference_loss(z2, ls2, ldw2, sigma=0.8)
    assert bool(jnp.allclose(loss2, ref2, rtol=1e-4, atol=1e-5)), (loss2, ref2)

    print("KERNEL_OK")
</pallas_src>

<mosaic_0001>
module attributes {stable_mosaic.version = 11 : i64} {
  func.func @kernel(%arg0: i32, %arg1: i32, %arg2: memref<2x8x256xf32, #tpu.memory_space<vmem>>, %arg3: memref<2x4x256xf32, #tpu.memory_space<vmem>>, %arg4: memref<2x4x256xf32, #tpu.memory_space<vmem>>, %arg5: memref<2x4x256xf32, #tpu.memory_space<vmem>>, %arg6: memref<1x128xf32, #tpu.memory_space<vmem>>, %arg7: memref<2xf32, #tpu.memory_space<smem>>) attributes {dimension_semantics = [#tpu.dimension_semantics<parallel>, #tpu.dimension_semantics<arbitrary>], iteration_bounds = array<i64: 1, 1>, scalar_prefetch = 0 : i64, scratch_operands = 1 : i64, tpu.core_type = #tpu.core_type<tc>, window_params = [{transform_indices = @transform_0, window_bounds = array<i64: 2, 8, 256>}, {transform_indices = @transform_1, window_bounds = array<i64: 2, 4, 256>}, {transform_indices = @transform_2, window_bounds = array<i64: 2, 4, 256>}, {transform_indices = @transform_3, window_bounds = array<i64: 2, 4, 256>}, {transform_indices = @transform_4, window_bounds = array<i64: 1, 128>}]} {
    %c0_i32 = arith.constant 0 : i32
    %0 = arith.cmpi eq, %arg1, %c0_i32 : i32
    %1 = arith.extui %0 : i1 to i32
    %c0_i32_0 = arith.constant 0 : i32
    %2 = arith.cmpi ne, %1, %c0_i32_0 : i32
    scf.if %2 {
      %cst_20 = arith.constant 0.000000e+00 : f32
      %c0_21 = arith.constant 0 : index
      %35 = memref.load %arg7[%c0_21] : memref<2xf32, #tpu.memory_space<smem>>
      memref.store %cst_20, %arg7[%c0_21] : memref<2xf32, #tpu.memory_space<smem>>
      %cst_22 = arith.constant 0.000000e+00 : f32
      %c1_23 = arith.constant 1 : index
      %36 = memref.load %arg7[%c1_23] : memref<2xf32, #tpu.memory_space<smem>>
      memref.store %cst_22, %arg7[%c1_23] : memref<2xf32, #tpu.memory_space<smem>>
    } else {
    }
    %c0 = arith.constant 0 : index
    %3 = memref.load %arg7[%c0] : memref<2xf32, #tpu.memory_space<smem>>
    %c0_1 = arith.constant 0 : index
    %c0_2 = arith.constant 0 : index
    %c0_3 = arith.constant 0 : index
    %4 = vector.load %arg2[%c0_1, %c0_2, %c0_3] : memref<2x8x256xf32, #tpu.memory_space<vmem>>, vector<2x8x256xf32>
    %5 = arith.mulf %4, %4 : vector<2x8x256xf32>
    %6 = vector.shape_cast %5 : vector<2x8x256xf32> to vector<1x2x8x256xf32>
    %cst = arith.constant dense<0.000000e+00> : vector<1xf32>
    %7 = vector.multi_reduction <add>, %6, %cst [1, 2, 3] : vector<1x2x8x256xf32> to vector<1xf32>
    %8 = vector.shape_cast %7 : vector<1xf32> to vector<1x1x1x1xf32>
    %9 = vector.extract %8[0, 0, 0, 0] : f32 from vector<1x1x1x1xf32>
    %10 = arith.addf %3, %9 : f32
    %c0_4 = arith.constant 0 : index
    %11 = memref.load %arg7[%c0_4] : memref<2xf32, #tpu.memory_space<smem>>
    memref.store %10, %arg7[%c0_4] : memref<2xf32, #tpu.memory_space<smem>>
    %c0_5 = arith.constant 0 : index
    %c0_6 = arith.constant 0 : index
    %c0_7 = arith.constant 0 : index
    %12 = vector.load %arg3[%c0_5, %c0_6, %c0_7] : memref<2x4x256xf32, #tpu.memory_space<vmem>>, vector<2x4x256xf32>
    %13 = vector.shape_cast %12 : vector<2x4x256xf32> to vector<1x2x4x256xf32>
    %cst_8 = arith.constant dense<0.000000e+00> : vector<1xf32>
    %14 = vector.multi_reduction <add>, %13, %cst_8 [1, 2, 3] : vector<1x2x4x256xf32> to vector<1xf32>
    %15 = vector.shape_cast %14 : vector<1xf32> to vector<1x1x1x1xf32>
    %16 = vector.extract %15[0, 0, 0, 0] : f32 from vector<1x1x1x1xf32>
    %c0_9 = arith.constant 0 : index
    %c0_10 = arith.constant 0 : index
    %c0_11 = arith.constant 0 : index
    %17 = vector.load %arg4[%c0_9, %c0_10, %c0_11] : memref<2x4x256xf32, #tpu.memory_space<vmem>>, vector<2x4x256xf32>
    %18 = vector.shape_cast %17 : vector<2x4x256xf32> to vector<1x2x4x256xf32>
    %cst_12 = arith.constant dense<0.000000e+00> : vector<1xf32>
    %19 = vector.multi_reduction <add>, %18, %cst_12 [1, 2, 3] : vector<1x2x4x256xf32> to vector<1xf32>
    %20 = vector.shape_cast %19 : vector<1xf32> to vector<1x1x1x1xf32>
    %21 = vector.extract %20[0, 0, 0, 0] : f32 from vector<1x1x1x1xf32>
    %22 = arith.addf %16, %21 : f32
    %c0_13 = arith.constant 0 : index
    %c0_14 = arith.constant 0 : index
    %c0_15 = arith.constant 0 : index
    %23 = vector.load %arg5[%c0_13, %c0_14, %c0_15] : memref<2x4x256xf32, #tpu.memory_space<vmem>>, vector<2x4x256xf32>
    %24 = vector.shape_cast %23 : vector<2x4x256xf32> to vector<1x2x4x256xf32>
    %cst_16 = arith.constant dense<0.000000e+00> : vector<1xf32>
    %25 = vector.multi_reduction <add>, %24, %cst_16 [1, 2, 3] : vector<1x2x4x256xf32> to vector<1xf32>
    %26 = vector.shape_cast %25 : vector<1xf32> to vector<1x1x1x1xf32>
    %27 = vector.extract %26[0, 0, 0, 0] : f32 from vector<1x1x1x1xf32>
    %28 = arith.addf %22, %27 : f32
    %c1 = arith.constant 1 : index
    %29 = memref.load %arg7[%c1] : memref<2xf32, #tpu.memory_space<smem>>
    %30 = arith.addf %29, %28 : f32
    %c1_17 = arith.constant 1 : index
    %31 = memref.load %arg7[%c1_17] : memref<2xf32, #tpu.memory_space<smem>>
    memref.store %30, %arg7[%c1_17] : memref<2xf32, #tpu.memory_space<smem>>
    %c0_i32_18 = arith.constant 0 : i32
    %32 = arith.cmpi eq, %arg1, %c0_i32_18 : i32
    %33 = arith.extui %32 : i1 to i32
    %c0_i32_19 = arith.constant 0 : i32
    %34 = arith.cmpi ne, %33, %c0_i32_19 : i32
    scf.if %34 {
      %35 = tpu.iota {dimensions = array<i32: 1>} : vector<1x128xi32>
      %c0_i32_20 = arith.constant 0 : i32
      %36 = vector.broadcast %c0_i32_20 : i32 to vector<1x128xi32>
      %37 = arith.cmpi eq, %35, %36 : vector<1x128xi32>
      %c0_21 = arith.constant 0 : index
      %38 = memref.load %arg7[%c0_21] : memref<2xf32, #tpu.memory_space<smem>>
      %c1_i32 = arith.constant 1 : i32
      %39 = vector.broadcast %c1_i32 : i32 to vector<1x128xi32>
      %40 = arith.cmpi eq, %35, %39 : vector<1x128xi32>
      %c1_22 = arith.constant 1 : index
      %41 = memref.load %arg7[%c1_22] : memref<2xf32, #tpu.memory_space<smem>>
      %cst_23 = arith.constant 0.000000e+00 : f32
      %42 = vector.broadcast %41 : f32 to vector<1x128xf32>
      %43 = vector.broadcast %cst_23 : f32 to vector<1x128xf32>
      %44 = arith.select %40, %42, %43 : vector<1x128xi1>, vector<1x128xf32>
      %45 = vector.broadcast %38 : f32 to vector<1x128xf32>
      %46 = arith.select %37, %45, %44 : vector<1x128xi1>, vector<1x128xf32>
      %c0_24 = arith.constant 0 : index
      %c0_25 = arith.constant 0 : index
      %47 = vector.load %arg6[%c0_24, %c0_25] : memref<1x128xf32, #tpu.memory_space<vmem>>, vector<1x128xf32>
      tpu.vector_store %arg6[%c0_24, %c0_25], %46 {strides = array<i32>} : memref<1x128xf32, #tpu.memory_space<vmem>>, vector<1x128xf32>,
    } else {
    }
    return
  }
  func.func @transform_0(%arg0: i32, %arg1: i32) -> (i32, i32, i32) {
    %c1_i32 = arith.constant 1 : i32
    %0 = arith.muli %arg0, %c1_i32 : i32
    %1 = arith.addi %0, %arg1 : i32
    %c0_i32 = arith.constant 0 : i32
    %2 = arith.minsi %1, %c0_i32 : i32
    %c0_i32_0 = arith.constant 0 : i32
    %c0_i32_1 = arith.constant 0 : i32
    %c0_i32_2 = arith.constant 0 : i32
    return %2, %c0_i32_0, %c0_i32_1 : i32, i32, i32
  }
  func.func @transform_1(%arg0: i32, %arg1: i32) -> (i32, i32, i32) {
    %c1_i32 = arith.constant 1 : i32
    %0 = arith.muli %arg0, %c1_i32 : i32
    %1 = arith.addi %0, %arg1 : i32
    %c0_i32 = arith.constant 0 : i32
    %2 = arith.minsi %1, %c0_i32 : i32
    %c0_i32_0 = arith.constant 0 : i32
    %c0_i32_1 = arith.constant 0 : i32
    %c0_i32_2 = arith.constant 0 : i32
    return %2, %c0_i32_0, %c0_i32_1 : i32, i32, i32
  }
  func.func @transform_2(%arg0: i32, %arg1: i32) -> (i32, i32, i32) {
    %c1_i32 = arith.constant 1 : i32
    %0 = arith.muli %arg0, %c1_i32 : i32
    %1 = arith.addi %0, %arg1 : i32
    %c0_i32 = arith.constant 0 : i32
    %2 = arith.minsi %1, %c0_i32 : i32
    %c0_i32_0 = arith.constant 0 : i32
    %c0_i32_1 = arith.constant 0 : i32
    %c0_i32_2 = arith.constant 0 : i32
    return %2, %c0_i32_0, %c0_i32_1 : i32, i32, i32
  }
  func.func @transform_3(%arg0: i32, %arg1: i32) -> (i32, i32, i32) {
    %c1_i32 = arith.constant 1 : i32
    %0 = arith.muli %arg0, %c1_i32 : i32
    %1 = arith.addi %0, %arg1 : i32
    %c0_i32 = arith.constant 0 : i32
    %2 = arith.minsi %1, %c0_i32 : i32
    %c0_i32_0 = arith.constant 0 : i32
    %c0_i32_1 = arith.constant 0 : i32
    %c0_i32_2 = arith.constant 0 : i32
    return %2, %c0_i32_0, %c0_i32_1 : i32, i32, i32
  }
  func.func @transform_4(%arg0: i32, %arg1: i32) -> (i32, i32) {
    %c0_i32 = arith.constant 0 : i32
    %c0_i32_0 = arith.constant 0 : i32
    return %arg0, %c0_i32 : i32, i32
  }
}

</mosaic_0001>

<llo_original>
// kernel: _lambda_.1
$region0: #{_lambda_.1}
  #allocation0 [shape = 'u32[]', space=smem, size = 0x4, offset = 0x4, fixed_abs, tag = 'smem constant byte address 0x4 - core index']
  #allocation1 [shape = 'u32[144,128]{1,0:T(1,128)}', space=vmem, size = 0x12000, scoped, tag = 'internal scratch']
  #allocation2 [shape = 'f32[2]{0:T(128)}', space=smem, size = 0x200, scoped, tag = 'scratch operand']
  %s0 = inlined_call_operand.hbm [shape: f32[2,8,256], index: 0, kind: input, shape index: {}]
  %s1 = inlined_call_operand.hbm [shape: f32[2,4,256], index: 1, kind: input, shape index: {}]
  %s2 = inlined_call_operand.hbm [shape: f32[2,4,256], index: 2, kind: input, shape index: {}]
  %s3 = inlined_call_operand.hbm [shape: f32[2,4,256], index: 3, kind: input, shape index: {}]
  %s4 = inlined_call_operand.vmem [shape: f32[1,128], index: 4, kind: output, shape index: {}]
  %s5 = sld [smem:[#allocation0]]
  $region50: #{_lambda_.1} parent=0
    _
  %s7 = ssub.s32 1, %s5
  %s8 = scalar_select 0, %s7, %s5
  $region1: #{_lambda_.1} parent=0
    #allocation3 [shape = 'u8[16384]{0}', space=vmem, size = 0x4000, scoped, tag = 'input window, operand 0, single buffered']
    #allocation4 [shape = 's32[1]{0}', space=sflag, size = 0x4, scoped, tag = 'scoped memory for _lambda_.1']
    #allocation5 [shape = 'u8[8192]{0}', space=vmem, size = 0x2000, scoped, tag = 'input window, operand 1, single buffered']
    #allocation6 [shape = 's32[1]{0}', space=sflag, size = 0x4, scoped, tag = 'scoped memory for _lambda_.1']
    #allocation7 [shape = 'u8[8192]{0}', space=vmem, size = 0x2000, scoped, tag = 'input window, operand 2, single buffered']
    #allocation8 [shape = 'u8[8192]{0}', space=vmem, size = 0x2000, scoped, tag = 'input window, operand 3, single buffered']
    #allocation9 [shape = 's32[1]{0}', space=sflag, size = 0x4, scoped, tag = 'scoped memory for _lambda_.1']
    %9 = vsyncpa [#allocation4], 0
    %10 = vsyncpa [#allocation6], 0
    %11 = vsyncpa [#allocation9], 0
    // Predicated region
    $region2: #{_lambda_.1} parent=1 // pred_check
      _
    $region3: #{_lambda_.1} parent=1 // pred_check_branch
      %13 = sbr.rel (0) target = $region5
    $region4: #{_lambda_.1} parent=1 // pred_region
      %s14 = sadd.s32 0, 0
      %p15 = scmp.lt.s32.totalorder %s14, 0
      %s16 = scalar_select %p15, %s14, 0
      %s17 = smul.u32 2, %s16
      %s19 = ssub.s32 512, 512
      %20 = vsyncadd [#allocation4], %s19
      %s21 = smul.addr %s17, 2
      %s22 = smul.addr %s21, 128
      %s23 = scalar_lea.hbm %s0, %s22
      %s24 = sshll.u32 [#allocation3], 4
      %s25 = int_to_ptr.vmem [resolvable:$true] %s24
      %30 = dma.hbm_to_vmem [thread:$0]  %s23, 512, %s25, [#allocation4], 256, 256, 16
    $region5: #{_lambda_.1} parent=1 // pred_fallthru
      _
    // Predicated region
    $region6: #{_lambda_.1} parent=1 // pred_check
      _
    $region7: #{_lambda_.1} parent=1 // pred_check_branch
      %32 = sbr.rel (0) target = $region9
    $region8: #{_lambda_.1} parent=1 // pred_region
      %s33 = sadd.s32 0, 0
      %p34 = scmp.lt.s32.totalorder %s33, 0
      %s35 = scalar_select %p34, %s33, 0
      %s36 = smul.u32 2, %s35
      %s38 = ssub.s32 256, 256
      %39 = vsyncadd [#allocation6], %s38
      %s40 = smul.addr %s36, 2
      %s41 = smul.addr %s40, 64
      %s42 = scalar_lea.hbm %s1, %s41
      %s43 = sshll.u32 [#allocation5], 4
      %s44 = int_to_ptr.vmem [resolvable:$true] %s43
      %49 = dma.hbm_to_vmem [thread:$0]  %s42, 256, %s44, [#allocation6], 128, 128, 8
    $region9: #{_lambda_.1} parent=1 // pred_fallthru
      _
    // Predicated region
    $region10: #{_lambda_.1} parent=1 // pred_check
      _
    $region11: #{_lambda_.1} parent=1 // pred_check_branch
      %51 = sbr.rel (0) target = $region13
    $region12: #{_lambda_.1} parent=1 // pred_region
      %s52 = sadd.s32 0, 0
      %p53 = scmp.lt.s32.totalorder %s52, 0
      %s54 = scalar_select %p53, %s52, 0
      %s55 = smul.u32 2, %s54
      %s57 = ssub.s32 256, 256
      %58 = vsyncadd [#allocation6], %s57
      %s59 = smul.addr %s55, 2
      %s60 = smul.addr %s59, 64
      %s61 = scalar_lea.hbm %s2, %s60
      %s62 = sshll.u32 [#allocation7], 4
      %s63 = int_to_ptr.vmem [resolvable:$true] %s62
      %68 = dma.hbm_to_vmem [thread:$0]  %s61, 256, %s63, [#allocation6], 128, 128, 8
    $region13: #{_lambda_.1} parent=1 // pred_fallthru
      _
    // Predicated region
    $region14: #{_lambda_.1} parent=1 // pred_check
      _
    $region15: #{_lambda_.1} parent=1 // pred_check_branch
      %70 = sbr.rel (0) target = $region17
    $region16: #{_lambda_.1} parent=1 // pred_region
      %s71 = sadd.s32 0, 0
      %p72 = scmp.lt.s32.totalorder %s71, 0
      %s73 = scalar_select %p72, %s71, 0
      %s74 = smul.u32 2, %s73
      %s76 = ssub.s32 256, 256
      %77 = vsyncadd [#allocation9], %s76
      %s78 = smul.addr %s74, 2
      %s79 = smul.addr %s78, 64
      %s80 = scalar_lea.hbm %s3, %s79
      %s81 = sshll.u32 [#allocation8], 4
      %s82 = int_to_ptr.vmem [resolvable:$true] %s81
      %87 = dma.hbm_to_vmem [thread:$0]  %s80, 256, %s82, [#allocation9], 128, 128, 8
    $region17: #{_lambda_.1} parent=1 // pred_fallthru
      _
    // Predicated region
    $region18: #{_lambda_.1} parent=1 // pred_check
      _
    $region19: #{_lambda_.1} parent=1 // pred_check_branch
      %89 = sbr.rel (0) target = $region21
    $region20: #{_lambda_.1} parent=1 // pred_region
      %90 = dma.done [#allocation4], 512
    $region21: #{_lambda_.1} parent=1 // pred_fallthru
      _
    // Predicated region
    $region22: #{_lambda_.1} parent=1 // pred_check
      _
    $region23: #{_lambda_.1} parent=1 // pred_check_branch
      %92 = sbr.rel (0) target = $region25
    $region24: #{_lambda_.1} parent=1 // pred_region
      %93 = dma.done [#allocation6], 256
    $region25: #{_lambda_.1} parent=1 // pred_fallthru
      _
    // Predicated region
    $region26: #{_lambda_.1} parent=1 // pred_check
      _
    $region27: #{_lambda_.1} parent=1 // pred_check_branch
      %95 = sbr.rel (0) target = $region29
    $region28: #{_lambda_.1} parent=1 // pred_region
      %96 = dma.done [#allocation6], 256
    $region29: #{_lambda_.1} parent=1 // pred_fallthru
      _
    // Predicated region
    $region30: #{_lambda_.1} parent=1 // pred_check
      _
    $region31: #{_lambda_.1} parent=1 // pred_check_branch
      %98 = sbr.rel (0) target = $region33
    $region32: #{_lambda_.1} parent=1 // pred_region
      %99 = dma.done [#allocation9], 256
    $region33: #{_lambda_.1} parent=1 // pred_fallthru
      _
    %s100 = sadd.s32 0, 0
    %p101 = scmp.lt.s32.totalorder %s100, 0
    %s102 = scalar_select %p101, %s100, 0
    %s103 = smul.u32 2, %s102
    %s104 = sadd.s32 0, 0
    %p105 = scmp.lt.s32.totalorder %s104, 0
    %s106 = scalar_select %p105, %s104, 0
    %s107 = smul.u32 2, %s106
    %s108 = sadd.s32 0, 0
    %p109 = scmp.lt.s32.totalorder %s108, 0
    %s110 = scalar_select %p109, %s108, 0
    %s111 = smul.u32 2, %s110
    %s112 = sadd.s32 0, 0
    %p113 = scmp.lt.s32.totalorder %s112, 0
    %s114 = scalar_select %p113, %s112, 0
    %s115 = smul.u32 2, %s114
    %p116 = scmp.eq.s32.totalorder 0, 0
    // Predicated region
    $region34: #{_lambda_.1} parent=1 // pred_check
      %p117 = pneg %p116
    $region35: #{_lambda_.1} parent=1 // pred_check_branch
      %119 = sbr.rel (%p117) target = $region37
    $region36: #{_lambda_.1} parent=1 // pred_region
      %s120 = scalar_lea.smem [#allocation2], 0
      %121 = sst [smem:[%s120]] 0.0
      %s122 = scalar_lea.smem [#allocation2], 1
      %123 = sst [smem:[%s122]] 0.0
    $region37: #{_lambda_.1} parent=1 // pred_fallthru
      _
    %s124 = sld [smem:[#allocation2]]
    %v125 = vld [vmem:[#allocation3] sm:$0xff]
    %v126 = vld [vmem:[#allocation3 + $0x8] sm:$0xff]
    %v127 = vld [vmem:[#allocation3 + $0x10] sm:$0xff]
    %v128 = vld [vmem:[#allocation3 + $0x18] sm:$0xff]
    %v129 = vmul.f32 %v125, %v125
    %v130 = vmul.f32 %v126, %v126
    %v131 = vmul.f32 %v127, %v127
    %v132 = vmul.f32 %v128, %v128
    %v133 = vadd.f32 %v129, %v130
    %v134 = vadd.f32 %v133, %v131
    %v135 = vadd.f32 %v134, %v132
    %136 = vadd.xlane.f32.xlu0 %v135
    %v137 = vpop.xlane.xlu0 %136
    %v138 = vrot.slane %v137, 4
    %v139 = vadd.f32 %v137, %v138
    %v140 = vrot.slane %v139, 2
    %v141 = vadd.f32 %v139, %v140
    %v142 = vrot.slane %v141, 1
    %v143 = vadd.f32 %v141, %v142
    %s144 = vtos %v143
    %s145 = sadd.f32 %s124, %s144
    %s146 = scalar_lea.smem [#allocation2], 0
    %147 = sst [smem:[%s146]] %s145
    %v148 = vld [vmem:[#allocation5] sm:$0xff]
    %v149 = vld [vmem:[#allocation5 + $0x8] sm:$0xff]
    %v152 = vcombine.high %v148, %v148
    %v153 = vcombine.high %v149, %v149
    %vm156 = vcmask 1043456
    %v157 = vsel %vm156, %v148, 0.0
    %v158 = vsel %vm156, %v152, 0.0
    %v159 = vadd.f32 %v157, %v158
    %v160 = vsel %vm156, %v149, 0.0
    %v161 = vadd.f32 %v159, %v160
    %v162 = vsel %vm156, %v153, 0.0
    %v163 = vadd.f32 %v161, %v162
    %164 = vadd.xlane.f32.xlu0 %v163
    %v165 = vpop.xlane.xlu0 %164
    %v166 = vrot.slane %v165, 4
    %v167 = vadd.f32 %v165, %v166
    %v168 = vrot.slane %v167, 2
    %v169 = vadd.f32 %v167, %v168
    %v170 = vrot.slane %v169, 1
    %v171 = vadd.f32 %v169, %v170
    %s172 = vtos %v171
    %v173 = vld [vmem:[#allocation7] sm:$0xff]
    %v174 = vld [vmem:[#allocation7 + $0x8] sm:$0xff]
    %v177 = vcombine.high %v173, %v173
    %v178 = vcombine.high %v174, %v174
    %v181 = vsel %vm156, %v173, 0.0
    %v182 = vsel %vm156, %v177, 0.0
    %v183 = vadd.f32 %v181, %v182
    %v184 = vsel %vm156, %v174, 0.0
    %v185 = vadd.f32 %v183, %v184
    %v186 = vsel %vm156, %v178, 0.0
    %v187 = vadd.f32 %v185, %v186
    %188 = vadd.xlane.f32.xlu0 %v187
    %v189 = vpop.xlane.xlu0 %188
    %v190 = vrot.slane %v189, 4
    %v191 = vadd.f32 %v189, %v190
    %v192 = vrot.slane %v191, 2
    %v193 = vadd.f32 %v191, %v192
    %v194 = vrot.slane %v193, 1
    %v195 = vadd.f32 %v193, %v194
    %s196 = vtos %v195
    %s197 = sadd.f32 %s172, %s196
    %v198 = vld [vmem:[#allocation8] sm:$0xff]
    %v199 = vld [vmem:[#allocation8 + $0x8] sm:$0xff]
    %v202 = vcombine.high %v198, %v198
    %v203 = vcombine.high %v199, %v199
    %v206 = vsel %vm156, %v198, 0.0
    %v207 = vsel %vm156, %v202, 0.0
    %v208 = vadd.f32 %v206, %v207
    %v209 = vsel %vm156, %v199, 0.0
    %v210 = vadd.f32 %v208, %v209
    %v211 = vsel %vm156, %v203, 0.0
    %v212 = vadd.f32 %v210, %v211
    %213 = vadd.xlane.f32.xlu0 %v212
    %v214 = vpop.xlane.xlu0 %213
    %v215 = vrot.slane %v214, 4
    %v216 = vadd.f32 %v214, %v215
    %v217 = vrot.slane %v216, 2
    %v218 = vadd.f32 %v216, %v217
    %v219 = vrot.slane %v218, 1
    %v220 = vadd.f32 %v218, %v219
    %s221 = vtos %v220
    %s222 = sadd.f32 %s197, %s221
    %s223 = sld [smem:[#allocation2 + $0x1]]
    %s224 = sadd.f32 %s223, %s222
    %s225 = scalar_lea.smem [#allocation2], 1
    %226 = sst [smem:[%s225]] %s224
    // Predicated region
    $region38: #{_lambda_.1} parent=1 // pred_check
      %p227 = pneg %p116
    $region39: #{_lambda_.1} parent=1 // pred_check_branch
      %229 = sbr.rel (%p227) target = $region41
    $region40: #{_lambda_.1} parent=1 // pred_region
      %v230 = vlaneseq
      %v231 = vand.u32 %v230, 127
      %vm232 = vcmp.eq.s32.totalorder %v231, 0
      %s233 = sld [smem:[#allocation2]]
      %vm234 = vcmp.eq.s32.totalorder %v231, 1
      %s235 = sld [smem:[#allocation2 + $0x1]]
      %v236 = vstv %s235
      %v237 = vsel %vm234, %v236, 0.0
      %v238 = vstv %s233
      %v239 = vsel %vm232, %v238, %v237
      %240 = vst [vmem:[%s4] sm:$0x1] %v239
    $region41: #{_lambda_.1} parent=1 // pred_fallthru
      _
    // Predicated region
    $region42: #{_lambda_.1} parent=1 // pred_check
      _
    $region43: #{_lambda_.1} parent=1 // pred_check_branch
      %242 = sbr.rel (0) target = $region45
    $region44: #{_lambda_.1} parent=1 // pred_region
      _
    $region45: #{_lambda_.1} parent=1 // pred_fallthru
      _
    // Predicated region
    $region46: #{_lambda_.1} parent=1 // pred_check
      _
    $region47: #{_lambda_.1} parent=1 // pred_check_branch
      %244 = sbr.rel (0) target = $region49
    $region48: #{_lambda_.1} parent=1 // pred_region
      _
    $region49: #{_lambda_.1} parent=1 // pred_fallthru
      _
    %245 = vsyncpa [#allocation4], 1
    %246 = vsyncpa [#allocation6], 1
    %247 = vsyncpa [#allocation9], 1

</llo_original>
